<compile_context>
chip_gen: v7x
topology: tpu7x:2x2x1
jax: 0.10.0
libtpu: 0.0.40
codegen_flags: <defaults>
</compile_context>

<pallas_src>
import functools

import jax
import jax.numpy as jnp
import numpy as np
from jax.experimental import pallas as pl
from jax.experimental.pallas import tpu as pltpu

COMPUTE_DTYPE = jnp.bfloat16   # MXU-native operand dtype; accumulation is fp32
_LANE = 128                    # lane (minor-axis) tiling


def _round_up(x, m):
    return ((x + m - 1) // m) * m


def _pick_tile(n, candidates, prefer_multi=False):
    """Largest candidate tile that divides n (optionally preferring >=2 blocks)."""
    divisors = [c for c in candidates if n % c == 0]
    if not divisors:
        return n
    if prefer_multi:
        multi = [c for c in divisors if n // c >= 2]
        if multi:
            return max(multi)
    return max(divisors)


def _pad2d(x, rows, cols, dtype=jnp.float32):
    out = jnp.zeros((rows, cols), dtype)
    return out.at[: x.shape[0], : x.shape[1]].set(x.astype(dtype))


# ----------------------------------------------------------------------------
# Kernel 1: per-relation XW_r = X_src_r @ W_neigh_r precompute (once per layer)
# ----------------------------------------------------------------------------
def xw_precompute_kernel(sidx_ref, x_ref, wn_ref, xw_ref):
    del sidx_ref  # only consumed by the index_maps (scalar prefetch)
    xw_ref[0] = jnp.dot(x_ref[...], wn_ref[0],
                        preferred_element_type=jnp.float32).astype(xw_ref.dtype)


def xw_precompute_call(src_idx, x_all, wn_stack, *, n_pad, tm, fout_p):
    R = wn_stack.shape[0]
    fin_p = x_all.shape[1]
    bpt = n_pad // tm  # row blocks per node type inside the concatenated buffer
    return pl.pallas_call(
        xw_precompute_kernel,
        out_shape=jax.ShapeDtypeStruct((R, n_pad, fout_p), COMPUTE_DTYPE),
        grid_spec=pltpu.PrefetchScalarGridSpec(
            num_scalar_prefetch=1,
            grid=(R, n_pad // tm),
            in_specs=[
                # source rows selected by the scalar-prefetched type index
                pl.BlockSpec((tm, fin_p),
                             lambda r, i, sidx: (sidx[r] * bpt + i, 0)),
                pl.BlockSpec((1, fin_p, fout_p), lambda r, i, sidx: (r, 0, 0)),
            ],
            out_specs=pl.BlockSpec((1, tm, fout_p),
                                   lambda r, i, sidx: (r, i, 0)),
        ),
        compiler_params=pltpu.CompilerParams(
            dimension_semantics=("arbitrary", "parallel")),
    )(src_idx, x_all, wn_stack)


# ----------------------------------------------------------------------------
# Kernel 2: fused hetero-SAGE layer + (optional ReLU) + sigmoid-gate epilogue
# ----------------------------------------------------------------------------
def fused_sage_gate_kernel(x_dst_ref, a_ref, xw_ref, invdeg_ref, ws_ref,
                           b_ref, wg_ref, bg_ref, o_ref, acc_ref, *,
                           apply_relu):
    """grid = (dst-row blocks [parallel], relations, source K tiles).

    An fp32 accumulator tile lives in VMEM scratch across the (relation, K)
    reduction axes; the HBM output block (indexed by the row axis only) is
    written exactly once, in the fused ReLU + sigmoid-gate epilogue.
    """
    r = pl.program_id(1)
    k = pl.program_id(2)
    last_r = pl.num_programs(1) - 1
    last_k = pl.num_programs(2) - 1

    # Hoisted self term + pre-summed bias (computed once per row block).
    @pl.when(jnp.logical_and(r == 0, k == 0))
    def _():
        acc_ref[...] = (
            jnp.dot(x_dst_ref[...], ws_ref[...],
                    preferred_element_type=jnp.float32) + b_ref[...])

    # Neighbor path: exact 0/1 int8 mask tile (cast to bf16 for the MXU) times
    # the precomputed XW_r K-tile, scaled by the fp32 per-(relation,row) 1/deg.
    a = a_ref[0].astype(jnp.bfloat16)
    contrib = jnp.dot(a, xw_ref[0], preferred_element_type=jnp.float32)
    acc_ref[...] += invdeg_ref[0] * contrib

    # Fused epilogue: (optional ReLU) -> h * sigmoid(h @ Wg + bg) -> store.
    @pl.when(jnp.logical_and(r == last_r, k == last_k))
    def _():
        h = acc_ref[...]
        if apply_relu:
            h = jnp.maximum(h, 0.0)
        logits = (jnp.dot(h.astype(wg_ref.dtype), wg_ref[...],
                          preferred_element_type=jnp.float32) + bg_ref[...])
        o_ref[...] = (h * jax.nn.sigmoid(logits)).astype(o_ref.dtype)


def fused_sage_gate_call(x_all, a_stack, xw_stack, invdeg, ws_sum, b_sum,
                         gate_w, gate_b, *, n_pad, tm, tk, fout_p, dst_blk_off,
                         apply_relu, out_dtype):
    R = a_stack.shape[0]
    fin_p = x_all.shape[1]
    grid = (n_pad // tm, R, n_pad // tk)
    out_bytes = jnp.dtype(out_dtype).itemsize

    # Advisory cost estimate so XLA can schedule/overlap the per-dst calls.
    n_row_blocks = n_pad // tm
    flops = int(2 * R * n_pad * n_pad * fout_p        # mask @ XW
                + 2 * n_pad * fin_p * fout_p          # self term
                + 2 * n_pad * fout_p * fout_p)        # gate matmul
    bytes_accessed = int(R * n_pad * n_pad                         # int8 mask
                         + n_row_blocks * R * n_pad * fout_p * 2   # XW re-reads
                         + n_pad * fin_p * 2                       # X_dst
                         + n_pad * fout_p * out_bytes              # output
                         + (fin_p + 2 * fout_p) * fout_p * 2)      # weights
    cost = pl.CostEstimate(flops=flops, transcendentals=int(n_pad * fout_p),
                           bytes_accessed=bytes_accessed)

    # Explicit VMEM budget: double-buffered streamed tiles + resident weights
    # and fp32 accumulator.  Bounded by (tm, tk), independent of graph size.
    est_vmem = (2 * (tm * tk                      # int8 A tile
                     + tk * fout_p * 2            # bf16 XW tile
                     + tm * fin_p * 2             # bf16 X_dst tile
                     + tm * 4                     # fp32 1/deg tile
                     + tm * fout_p * out_bytes)   # output tile
                + 2 * (fin_p * fout_p * 2 + fout_p * fout_p * 2
                       + 2 * fout_p * 4)          # weights + biases
                + tm * fout_p * 4)                # fp32 accumulator scratch
    vmem_limit = int(min(max(2 * est_vmem, 32 * 1024 * 1024), 64 * 1024 * 1024))

    kernel = functools.partial(fused_sage_gate_kernel, apply_relu=apply_relu)
    return pl.pallas_call(
        kernel,
        out_shape=jax.ShapeDtypeStruct((n_pad, fout_p), out_dtype),
        grid_spec=pltpu.PrefetchScalarGridSpec(
            num_scalar_prefetch=0,
            grid=grid,
            in_specs=[
                # X_dst straight out of the shared concatenated buffer
                pl.BlockSpec((tm, fin_p), lambda i, r, k: (dst_blk_off + i, 0)),
                pl.BlockSpec((1, tm, tk), lambda i, r, k: (r, i, k)),     # mask
                pl.BlockSpec((1, tk, fout_p), lambda i, r, k: (r, k, 0)), # XW_r
                pl.BlockSpec((1, tm, 1), lambda i, r, k: (r, i, 0)),      # 1/deg
                pl.BlockSpec((fin_p, fout_p), lambda i, r, k: (0, 0)),    # sum W_self
                pl.BlockSpec((1, fout_p), lambda i, r, k: (0, 0)),        # sum b
                pl.BlockSpec((fout_p, fout_p), lambda i, r, k: (0, 0)),   # W_gate
                pl.BlockSpec((1, fout_p), lambda i, r, k: (0, 0)),        # b_gate
            ],
            out_specs=pl.BlockSpec((tm, fout_p), lambda i, r, k: (i, 0)),
            scratch_shapes=[pltpu.VMEM((tm, fout_p), jnp.float32)],
        ),
        compiler_params=pltpu.CompilerParams(
            dimension_semantics=("parallel", "arbitrary", "arbitrary"),
            vmem_limit_bytes=vmem_limit),
        cost_estimate=cost,
    )(x_all, a_stack, xw_stack, invdeg, ws_sum, b_sum, gate_w, gate_b)


# ----------------------------------------------------------------------------
# One-time graph / parameter preprocessing (NOT per forward call)
# ----------------------------------------------------------------------------
def preprocess_graph(rel_list, node_counts):
    """rel_list entries are (rel, src_type, dst_type, raw 0/1 adjacency).

    Stores, per dst type, an int8 0/1 mask stack and an fp32 1/deg stack
    (the 'mean' aggregator normalization), plus the src-type index used by the
    XW precompute's scalar-prefetched index_map.
    """
    type_order = sorted(node_counts)
    type_block = {t: i for i, t in enumerate(type_order)}

    n_pad = _round_up(max(node_counts.values()), _LANE)       # lane-dense A minor axis
    tm = _pick_tile(n_pad, (512, 256, 128, 64), prefer_multi=True)  # >=2 row blocks for v7x
    tk = _pick_tile(n_pad, (2048, 1024, 512, 256, 128))             # bounded VMEM per step
    # TODO(synk): block-sparse skipping of all-zero (row, K) mask tiles via a
    # scalar-prefetched nonzero-tile table driving the K index_map.

    dst_groups = {}
    for rel, src, dst, adj in rel_list:
        dst_groups.setdefault(dst, []).append((rel, src, adj))

    per_dst = {}
    for dst, rels in dst_groups.items():
        masks, invdegs, src_idx, rel_names = [], [], [], []
        for rel, src, adj in rels:
            adj = jnp.asarray(adj)
            mask = (adj != 0)
            deg = jnp.maximum(mask.sum(axis=1).astype(jnp.float32), 1.0)
            m_pad = jnp.zeros((n_pad, n_pad), jnp.int8).at[
                : adj.shape[0], : adj.shape[1]].set(mask.astype(jnp.int8))
            inv = jnp.ones((n_pad, 1), jnp.float32).at[
                : adj.shape[0], 0].set(1.0 / deg)
            masks.append(m_pad)
            invdegs.append(inv)
            src_idx.append(type_block[src])
            rel_names.append(rel)
        per_dst[dst] = dict(
            a=jnp.stack(masks),                        # (R, n_pad, n_pad) int8 0/1
            invdeg=jnp.stack(invdegs),                 # (R, n_pad, 1) fp32
            src_idx=jnp.asarray(src_idx, jnp.int32),   # (R,)
            rels=tuple(rel_names),
        )
    return dict(type_order=type_order, type_block=type_block, n_pad=n_pad,
                tm=tm, tk=tk, node_counts=dict(node_counts), per_dst=per_dst)


def _pad_sage_params(graph, layer_params, fin, fout):
    fin_p = _round_up(fin, _LANE)
    fout_p = _round_up(fout, _LANE)
    per_dst = {}
    for dst, g in graph["per_dst"].items():
        ws_sum = jnp.zeros((fin_p, fout_p), jnp.float32)
        b_sum = jnp.zeros((1, fout_p), jnp.float32)
        wn_stack = []
        for rel in g["rels"]:
            p = layer_params[rel]
            ws_sum = ws_sum + _pad2d(p["w_self"], fin_p, fout_p)
            b_sum = b_sum.at[0, :fout].add(p["b"])
            wn_stack.append(_pad2d(p["w_neigh"], fin_p, fout_p, COMPUTE_DTYPE))
        per_dst[dst] = dict(ws=ws_sum.astype(COMPUTE_DTYPE),   # sum_r W_self_r
                            wn=jnp.stack(wn_stack),            # (R, fin_p, fout_p)
                            b=b_sum)                           # sum_r b_r (fp32)
    return per_dst


def _pad_gate_params(w, b, f):
    f_p = _round_up(f, _LANE)
    gw = _pad2d(w, f_p, f_p, COMPUTE_DTYPE)
    gb = jnp.zeros((1, f_p), jnp.float32).at[0, :f].set(b)
    return gw, gb


def prepare_params(graph, params, in_feats, hid_feats, out_feats):
    return dict(
        conv1=_pad_sage_params(graph, params["conv1"], in_feats, hid_feats),
        conv2=_pad_sage_params(graph, params["conv2"], hid_feats, out_feats),
        gate1=_pad_gate_params(params["gate1_w"], params["gate1_b"], hid_feats),
        gate2=_pad_gate_params(params["gate2_w"], params["gate2_b"], out_feats),
        fin_p=_round_up(in_feats, _LANE),
        hid_p=_round_up(hid_feats, _LANE),
        out_p=_round_up(out_feats, _LANE),
        out_feats=out_feats,
    )


# ----------------------------------------------------------------------------
# Forward
# ----------------------------------------------------------------------------
def _concat_types(graph, feats, f_pad, dtype):
    """Concatenate per-type features (padding where needed) into one buffer."""
    n_pad = graph["n_pad"]
    blocks = []
    for t in graph["type_order"]:
        v = feats.get(t)
        if v is None:
            blocks.append(jnp.zeros((n_pad, f_pad), dtype))
        elif v.shape == (n_pad, f_pad) and v.dtype == dtype:
            blocks.append(v)                      # layer outputs: already padded
        else:
            blocks.append(_pad2d(v, n_pad, f_pad, dtype))
    # TODO(synk): write per-dst kernel outputs in place into this concatenated
    # buffer via input_output_aliases to skip this small copy between layers.
    return jnp.concatenate(blocks, axis=0)


def fused_layer(graph, layer_pp, gate_w, gate_b, x_all, *, fout_p, apply_relu,
                out_dtype):
    n_pad, tm, tk = graph["n_pad"], graph["tm"], graph["tk"]
    out = {}
    for dst, g in graph["per_dst"].items():
        pp = layer_pp[dst]
        xw = xw_precompute_call(g["src_idx"], x_all, pp["wn"],
                                n_pad=n_pad, tm=tm, fout_p=fout_p)
        out[dst] = fused_sage_gate_call(
            x_all, g["a"], xw, g["invdeg"], pp["ws"], pp["b"], gate_w, gate_b,
            n_pad=n_pad, tm=tm, tk=tk, fout_p=fout_p,
            dst_blk_off=graph["type_block"][dst] * (n_pad // tm),
            apply_relu=apply_relu, out_dtype=out_dtype)
    return out   # dict of (n_pad, fout_p), already gated


def hgcn_with_gates_forward(graph, pp, inputs):
    x_all = _concat_types(graph, inputs, pp["fin_p"], COMPUTE_DTYPE)
    h = fused_layer(graph, pp["conv1"], *pp["gate1"], x_all,
                    fout_p=pp["hid_p"], apply_relu=True,
                    out_dtype=COMPUTE_DTYPE)      # bf16 out: no wrapper cast pass
    x_all = _concat_types(graph, h, pp["hid_p"], COMPUTE_DTYPE)
    h = fused_layer(graph, pp["conv2"], *pp["gate2"], x_all,
                    fout_p=pp["out_p"], apply_relu=False, out_dtype=jnp.float32)
    nc = graph["node_counts"]
    return {t: v[: nc[t], : pp["out_feats"]] for t, v in h.items()}


# ----------------------------------------------------------------------------
# Pure-JAX fp32 reference (original association order, no Pallas)
# ----------------------------------------------------------------------------
def ref_forward(rel_list, inputs, params):
    def layer(feats, lp):
        out = {}
        for rel, src, dst, adj in rel_list:
            p = lp[rel]
            deg = jnp.maximum(adj.sum(axis=1, keepdims=True), 1.0)
            a_norm = adj / deg                      # SAGEConv 'mean' aggregation
            t = (feats[dst] @ p["w_self"]
                 + (a_norm @ feats[src]) @ p["w_neigh"] + p["b"])
            out[dst] = out.get(dst, 0.0) + t
        return out

    h = layer(inputs, params["conv1"])
    h = {k: jnp.maximum(v, 0.0) for k, v in h.items()}
    h = {k: v * jax.nn.sigmoid(v @ params["gate1_w"] + params["gate1_b"])
         for k, v in h.items()}
    h = layer(h, params["conv2"])
    h = {k: v * jax.nn.sigmoid(v @ params["gate2_w"] + params["gate2_b"])
         for k, v in h.items()}
    return h


# ----------------------------------------------------------------------------
# Deterministic synthetic setup
# ----------------------------------------------------------------------------
def init_sage(key, fin, fout):
    k1, k2, k3 = jax.random.split(key, 3)
    return {
        "w_self": 0.1 * jax.random.normal(k1, (fin, fout), jnp.float32),
        "w_neigh": 0.1 * jax.random.normal(k2, (fin, fout), jnp.float32),
        "b": 0.1 * jax.random.normal(k3, (fout,), jnp.float32),
    }


if __name__ == "__main__":
    key = jax.random.PRNGKey(0)
    in_feats, hid_feats, out_feats = 8, 16, 8
    n_user, n_item = 260, 120          # n_pad=384 -> 3 row blocks x 3 K tiles

    # relations of the heterogeneous graph: (name, src_type, dst_type)
    rel_defs = [("follows", "user", "user"),
                ("buys", "user", "item"),
                ("bought_by", "item", "user")]

    keys = jax.random.split(key, 32)
    n_of = {"user": n_user, "item": n_item}
    rel_list = [
        (rel, src, dst,
         jax.random.bernoulli(keys[i], 0.15,
                              (n_of[dst], n_of[src])).astype(jnp.float32))
        for i, (rel, src, dst) in enumerate(rel_defs)
    ]

    inputs = {
        "user": jax.random.normal(keys[10], (n_user, in_feats), jnp.float32),
        "item": jax.random.normal(keys[11], (n_item, in_feats), jnp.float32),
    }

    params = {
        "conv1": {rel: init_sage(keys[12 + i], in_feats, hid_feats)
                  for i, (rel, _, _) in enumerate(rel_defs)},
        "conv2": {rel: init_sage(keys[16 + i], hid_feats, out_feats)
                  for i, (rel, _, _) in enumerate(rel_defs)},
        "gate1_w": 0.1 * jax.random.normal(keys[20], (hid_feats, hid_feats), jnp.float32),
        "gate1_b": 0.1 * jax.random.normal(keys[21], (hid_feats,), jnp.float32),
        "gate2_w": 0.1 * jax.random.normal(keys[22], (out_feats, out_feats), jnp.float32),
        "gate2_b": 0.1 * jax.random.normal(keys[23], (out_feats,), jnp.float32),
    }

    graph = preprocess_graph(rel_list, n_of)                                 # once per graph
    pparams = prepare_params(graph, params, in_feats, hid_feats, out_feats)  # once

    out = hgcn_with_gates_forward(graph, pparams, inputs)
    out = jax.tree_util.tree_map(jax.block_until_ready, out)

    ref = ref_forward(rel_list, inputs, params)
    for t in out:
        # Kernel matmuls use bf16 operands (fp32 accumulation, exact int8 mask,
        # fp32 1/deg), so compare with bf16-appropriate tolerance.
        np.testing.assert_allclose(np.asarray(out[t]), np.asarray(ref[t]),
                                   atol=5e-2, rtol=5e-2)

    # TODO(synk): DGL's sparse COO message passing is modeled with dense masked
    # adjacency matmuls; block-sparse skipping of all-zero mask tiles is not
    # implemented here.
    print("KERNEL_OK")
</pallas_src>

<mosaic_0001>
module attributes {stable_mosaic.version = 11 : i64} {
  func.func @xw_precompute_kernel(%arg0: i32, %arg1: i32, %arg2: memref<2xi32, #tpu.memory_space<smem>>, %arg3: memref<128x128xbf16, #tpu.memory_space<vmem>>, %arg4: memref<1x128x128xbf16, #tpu.memory_space<vmem>>, %arg5: memref<1x128x128xbf16, #tpu.memory_space<vmem>>) attributes {dimension_semantics = [#tpu.dimension_semantics<arbitrary>, #tpu.dimension_semantics<parallel>], iteration_bounds = array<i64: 2, 3>, scalar_prefetch = 1 : i64, scratch_operands = 0 : i64, tpu.core_type = #tpu.core_type<tc>, window_params = [{transform_indices = @transform_0, window_bounds = array<i64: 128, 128>}, {transform_indices = @transform_1, window_bounds = array<i64: 1, 128, 128>}, {transform_indices = @transform_2, window_bounds = array<i64: 1, 128, 128>}]} {
    %c0 = arith.constant 0 : index
    %c0_0 = arith.constant 0 : index
    %0 = vector.load %arg3[%c0, %c0_0] : memref<128x128xbf16, #tpu.memory_space<vmem>>, vector<128x128xbf16>
    %c0_1 = arith.constant 0 : index
    %c0_2 = arith.constant 0 : index
    %c0_3 = arith.constant 0 : index
    %1 = vector.load %arg4[%c0_1, %c0_2, %c0_3] : memref<1x128x128xbf16, #tpu.memory_space<vmem>>, vector<1x128x128xbf16>
    %2 = vector.shape_cast %1 : vector<1x128x128xbf16> to vector<128x128xbf16>
    %cst = arith.constant dense<0.000000e+00> : vector<128x128xf32>
    %3 = tpu.matmul %0, %2, %cst {dimension_numbers = #tpu.dot_dimension_numbers<[1], [0], [0], [1], [0, 0, 1, 1], [], []>} : vector<128x128xbf16>, vector<128x128xbf16>, vector<128x128xf32> -> vector<128x128xf32>
    %4 = arith.truncf %3 : vector<128x128xf32> to vector<128x128xbf16>
    %c0_4 = arith.constant 0 : index
    %c0_5 = arith.constant 0 : index
    %c0_6 = arith.constant 0 : index
    %5 = vector.load %arg5[%c0_4, %c0_5, %c0_6] : memref<1x128x128xbf16, #tpu.memory_space<vmem>>, vector<1x128x128xbf16>
    %6 = vector.shape_cast %5 : vector<1x128x128xbf16> to vector<128x128xbf16>
    %7 = vector.shape_cast %4 : vector<128x128xbf16> to vector<1x128x128xbf16>
    tpu.vector_store %arg5[%c0_4, %c0_5, %c0_6], %7 {strides = array<i32>} : memref<1x128x128xbf16, #tpu.memory_space<vmem>>, vector<1x128x128xbf16>,
    return
  }
  func.func @transform_0(%arg0: i32, %arg1: i32, %arg2: memref<2xi32, #tpu.memory_space<smem>>) -> (i32, i32) {
    %0 = arith.index_cast %arg0 : i32 to index
    %1 = memref.load %arg2[%0] : memref<2xi32, #tpu.memory_space<smem>>
    %c3_i32 = arith.constant 3 : i32
    %2 = arith.muli %1, %c3_i32 : i32
    %3 = arith.addi %2, %arg1 : i32
    %c0_i32 = arith.constant 0 : i32
    %c0_i32_0 = arith.constant 0 : i32
    return %3, %c0_i32 : i32, i32
  }
  func.func @transform_1(%arg0: i32, %arg1: i32, %arg2: memref<2xi32, #tpu.memory_space<smem>>) -> (i32, i32, i32) {
    %c0_i32 = arith.constant 0 : i32
    %c0_i32_0 = arith.constant 0 : i32
    %c0_i32_1 = arith.constant 0 : i32
    return %arg0, %c0_i32, %c0_i32_0 : i32, i32, i32
  }
  func.func @transform_2(%arg0: i32, %arg1: i32, %arg2: memref<2xi32, #tpu.memory_space<smem>>) -> (i32, i32, i32) {
    %c0_i32 = arith.constant 0 : i32
    %c0_i32_0 = arith.constant 0 : i32
    return %arg0, %arg1, %c0_i32 : i32, i32, i32
  }
}

</mosaic_0001>

<llo_original>
// kernel: tpu_custom_call.1
$region0: #{tpu_custom_call.1}
  #allocation0 [shape = 'u32[]', space=smem, size = 0x4, offset = 0x4, fixed_abs, tag = 'smem constant byte address 0x4 - core index']
  #allocation1 [shape = 'u32[144,128]{1,0:T(1,128)}', space=vmem, size = 0x12000, scoped, tag = 'internal scratch']
  #allocation2 [shape = 's32[1]{0}', space=sflag, size = 0x4, scoped, tag = 'scoped memory for tpu_custom_call.1']
  #allocation3 [shape = 'u8[512]{0}', space=smem, size = 0x200, scoped, tag = 'prefetched SMEM operand 0']
  %s0 = inlined_call_operand.hbm [shape: s32[2], index: 0, kind: input, shape index: {}]
  %s1 = inlined_call_operand.hbm [shape: bf16[768,128], index: 1, kind: input, shape index: {}]
  %s2 = inlined_call_operand.hbm [shape: bf16[2,128,128], index: 2, kind: input, shape index: {}]
  %s3 = inlined_call_operand.hbm [shape: bf16[2,384,128], index: 3, kind: output, shape index: {}]
  %s4 = sld [smem:[#allocation0]]
  $region49: #{tpu_custom_call.1} parent=0
    _
  %s6 = ssub.s32 1, %s4
  %s7 = scalar_select 0, %s6, %s4
  %9 = dma.hbm_to_smem %s0, 16, [#allocation3], [#allocation2]
  %10 = dma.done [#allocation2], 16
  %11 = sfence
  $region1: #{tpu_custom_call.1} parent=0
    #allocation4 [shape = 'u8[65536]{0}', space=vmem, size = 0x10000, scoped, tag = 'input window, operand 1']
    #allocation5 [shape = 's32[2]{0}', space=sflag, size = 0x8, scoped, tag = 'scoped memory for tpu_custom_call.1']
    #allocation6 [shape = 's32[2]{0}', space=sflag, size = 0x8, scoped, tag = 'scoped memory for tpu_custom_call.1']
    #allocation7 [shape = 'u8[65536]{0}', space=vmem, size = 0x10000, scoped, tag = 'input window, operand 2']
    #allocation8 [shape = 's32[2]{0}', space=sflag, size = 0x8, scoped, tag = 'scoped memory for tpu_custom_call.1']
    #allocation9 [shape = 'u8[65536]{0}', space=vmem, size = 0x10000, scoped, tag = 'output window, operand 0']
    %12 = vsyncpa [#allocation5], 0
    %s13 = scalar_lea.sflag [#allocation5], 1
    %14 = vsyncpa %s13, 0
    %15 = vsyncpa [#allocation8], 0
    %s16 = scalar_lea.sflag [#allocation8], 1
    %17 = vsyncpa %s16, 0
    %18 = vsyncpa [#allocation6], 0
    %s19 = scalar_lea.sflag [#allocation6], 1
    %20 = vsyncpa %s19, 0
    loop: start=0, step=1, limit=8
    $region2: #{tpu_custom_call.1} parent=1 // loop_pre_header
      _
    $region3: #{tpu_custom_call.1} parent=1 // loop_header
      %s22 = sphi 0, %s26
      %p23 = scmp.ge.s32.totalorder %s22, 8
      %s29 = sphi 0, %s41
      %s30 = sphi 0, %s37
      %s31 = sphi 0, %s29
      %s32 = sphi 0, %s30
      %s33 = sphi 0, %s31
      %s34 = sphi 0, %s32
      %s50 = sphi 0, %s52
      %s53 = sphi 0, %s50
      %s54 = sphi 0, %s53
      %s70 = sphi 0, %s54
      %s76 = sphi 0, %s78
      %s79 = sphi 0, %s76
      %s80 = sphi 0, %s79
      %s96 = sphi 0, %s80
      %s104 = sphi 0, %s106
      %s107 = sphi 0, %s104
      %s108 = sphi 0, %s107
      %s124 = sphi 0, %s108
    $region4: #{tpu_custom_call.1} parent=1 // loop_header_branch
      %25 = sbr.rel (%p23) target = $region8
    $region5: #{tpu_custom_call.1} parent=1 // loop_body
      %s27 = ssub.s32 %s22, 1
      %s28 = ssub.s32 %s22, 2
      %s35 = sadd.s32 1, %s30
      %p36 = scmp.ge.s32.totalorder %s35, 3
      %s37 = scalar_select %p36, 0, %s35
      %s38 = sadd.s32 1, %s29
      %s39 = scalar_select %p36, %s38, %s29
      %p40 = scmp.ge.s32.totalorder %s39, 2
      %s41 = scalar_select %p40, 0, %s39
      %s42 = sld [smem:[#allocation3 + %s29]]
      %s43 = smul.u32 %s42, 3
      %s44 = sadd.s32 %s43, %s30
      %s45 = sld [smem:[#allocation3 + %s41]]
      %s46 = smul.u32 %s45, 3
      %s47 = sadd.s32 %s46, %s37
      %s48 = ssub.s32 %s44, %s47
      %p49 = scmp.eq.s32.totalorder %s48, 0
      %s51 = sadd.s32 %s50, 1
      %s52 = scalar_select %p49, %s50, %s51
      %p55 = pneg %p49
      %p56 = scmp.eq.s32.totalorder %s22, 5
      %p57 = por %p55, %p56
      %p58 = scmp.ne.s32.totalorder %s50, %s53
      %p59 = scmp.eq.s32.totalorder %s22, 0
      %p60 = por %p58, %p59
      %p61 = scmp.ne.s32.totalorder %s50, %s53
      %p62 = scmp.eq.s32.totalorder %s27, 5
      %p63 = por %p61, %p62
      %p64 = scmp.ne.s32.totalorder %s53, %s54
      %p65 = scmp.eq.s32.totalorder %s27, 0
      %p66 = por %p64, %p65
      %p67 = scmp.ne.s32.totalorder %s53, %s54
      %p68 = scmp.eq.s32.totalorder %s28, 5
      %p69 = por %p67, %p68
      %p71 = scmp.ne.s32.totalorder %s54, %s70
      %p72 = scmp.eq.s32.totalorder %s28, 0
      %p73 = por %p71, %p72
      %s74 = ssub.s32 %s29, %s41
      %p75 = scmp.eq.s32.totalorder %s74, 0
      %s77 = sadd.s32 %s76, 1
      %s78 = scalar_select %p75, %s76, %s77
      %p81 = pneg %p75
      %p82 = scmp.eq.s32.totalorder %s22, 5
      %p83 = por %p81, %p82
      %p84 = scmp.ne.s32.totalorder %s76, %s79
      %p85 = scmp.eq.s32.totalorder %s22, 0
      %p86 = por %p84, %p85
      %p87 = scmp.ne.s32.totalorder %s76, %s79
      %p88 = scmp.eq.s32.totalorder %s27, 5
      %p89 = por %p87, %p88
      %p90 = scmp.ne.s32.totalorder %s79, %s80
      %p91 = scmp.eq.s32.totalorder %s27, 0
      %p92 = por %p90, %p91
      %p93 = scmp.ne.s32.totalorder %s79, %s80
      %p94 = scmp.eq.s32.totalorder %s28, 5
      %p95 = por %p93, %p94
      %p97 = scmp.ne.s32.totalorder %s80, %s96
      %p98 = scmp.eq.s32.totalorder %s28, 0
      %p99 = por %p97, %p98
      %s100 = ssub.s32 %s29, %s41
      %s101 = ssub.s32 %s30, %s37
      %s102 = sor.u32 %s100, %s101
      %p103 = scmp.eq.s32.totalorder %s102, 0
      %s105 = sadd.s32 %s104, 1
      %s106 = scalar_select %p103, %s104, %s105
      %p109 = pneg %p103
      %p110 = scmp.eq.s32.totalorder %s22, 5
      %p111 = por %p109, %p110
      %p112 = scmp.ne.s32.totalorder %s104, %s107
      %p113 = scmp.eq.s32.totalorder %s22, 0
      %p114 = por %p112, %p113
      %p115 = scmp.ne.s32.totalorder %s104, %s107
      %p116 = scmp.eq.s32.totalorder %s27, 5
      %p117 = por %p115, %p116
      %p118 = scmp.ne.s32.totalorder %s107, %s108
      %p119 = scmp.eq.s32.totalorder %s27, 0
      %p120 = por %p118, %p119
      %p121 = scmp.ne.s32.totalorder %s107, %s108
      %p122 = scmp.eq.s32.totalorder %s28, 5
      %p123 = por %p121, %p122
      %p125 = scmp.ne.s32.totalorder %s108, %s124
      %p126 = scmp.eq.s32.totalorder %s28, 0
      %p127 = por %p125, %p126
      %p128 = scmp.le.s32.totalorder 1, %s22
      %p129 = scmp.lt.s32.totalorder %s22, 7
      %p130 = pnand %p128, %p129
      %p131 = pneg %p130
      // Predicated region
      $region9: #{tpu_custom_call.1} parent=5 // pred_check
        _
      $region10: #{tpu_custom_call.1} parent=5 // pred_check_branch
        %133 = sbr.rel (%p130) target = $region12
      $region11: #{tpu_custom_call.1} parent=5 // pred_region
        %s134 = ssub.s32 %s22, 1
      $region12: #{tpu_custom_call.1} parent=5 // pred_fallthru
        _
      %p135 = scmp.lt.s32.totalorder %s22, 6
      // Predicated region
      $region13: #{tpu_custom_call.1} parent=5 // pred_check
        %p136 = pneg %p135
      $region14: #{tpu_custom_call.1} parent=5 // pred_check_branch
        %138 = sbr.rel (%p136) target = $region16
      $region15: #{tpu_custom_call.1} parent=5 // pred_region
        // Predicated region
        $region17: #{tpu_custom_call.1} parent=15 // pred_check
          %p139 = pneg %p60
        $region18: #{tpu_custom_call.1} parent=15 // pred_check_branch
          %141 = sbr.rel (%p139) target = $region20
        $region19: #{tpu_custom_call.1} parent=15 // pred_region
          %s142 = sand.u32 %s50, 1
          %s143 = scalar_lea.sflag [#allocation5], %s142
          %s144 = sand.u32 %s50, 1
          %s145 = smul.addr %s144, 64
          %s146 = scalar_lea.vmem [#allocation4], %s145
          %s147 = sld [smem:[#allocation3 + %s29]]
          %s148 = smul.u32 %s147, 3
          %s149 = sadd.s32 %s148, %s30
          %s150 = smul.u32 16, %s149
          %s152 = ssub.s32 1024, 1024
          %153 = vsyncadd %s143, %s152
          %s154 = smul.addr %s150, 64
          %s155 = scalar_lea.hbm %s1, %s154
          %s156 = sshll.u32 %s146, 4
          %s157 = int_to_ptr.vmem [resolvable:$true] %s156
          %162 = dma.hbm_to_vmem [thread:$0]  %s155, 1024, %s157, %s143, 64, 64, 4
        $region20: #{tpu_custom_call.1} parent=15 // pred_fallthru
          _
        // Predicated region
        $region21: #{tpu_custom_call.1} parent=15 // pred_check
          %p163 = pneg %p86
        $region22: #{tpu_custom_call.1} parent=15 // pred_check_branch
          %165 = sbr.rel (%p163) target = $region24
        $region23: #{tpu_custom_call.1} parent=15 // pred_region
          %s166 = sand.u32 %s76, 1
          %s167 = scalar_lea.sflag [#allocation8], %s166
          %s168 = sand.u32 %s76, 1
          %s169 = smul.addr %s168, 64
          %s170 = scalar_lea.vmem [#allocation7], %s169
          %s172 = ssub.s32 1024, 1024
          %173 = vsyncadd %s167, %s172
          %s174 = smul.addr %s29, 16
          %s175 = smul.addr %s174, 64
          %s176 = scalar_lea.hbm %s2, %s175
          %s177 = sshll.u32 %s170, 4
          %s178 = int_to_ptr.vmem [resolvable:$true] %s177
          %183 = dma.hbm_to_vmem [thread:$0]  %s176, 1024, %s178, %s167, 64, 64, 4
        $region24: #{tpu_custom_call.1} parent=15 // pred_fallthru
          _
      $region16: #{tpu_custom_call.1} parent=5 // pred_fallthru
        _
      %p184 = scmp.le.s32.totalorder 1, %s22
      %p185 = scmp.lt.s32.totalorder %s22, 7
      %p186 = pnand %p184, %p185
      %p187 = pneg %p186
      // Predicated region
      $region25: #{tpu_custom_call.1} parent=5 // pred_check
        _
      $region26: #{tpu_custom_call.1} parent=5 // pred_check_branch
        %189 = sbr.rel (%p186) target = $region28
      $region27: #{tpu_custom_call.1} parent=5 // pred_region
        %s190 = ssub.s32 %s22, 1
        %s191 = sand.u32 %s53, 1
        %s192 = scalar_lea.sflag [#allocation5], %s191
        %s193 = sand.u32 %s53, 1
        %s194 = smul.addr %s193, 64
        %s195 = scalar_lea.vmem [#allocation4], %s194
        // Predicated region
        $region29: #{tpu_custom_call.1} parent=27 // pred_check
          %p196 = pneg %p66
        $region30: #{tpu_custom_call.1} parent=27 // pred_check_branch
          %198 = sbr.rel (%p196) target = $region32
        $region31: #{tpu_custom_call.1} parent=27 // pred_region
          %199 = dma.done %s192, 1024
        $region32: #{tpu_custom_call.1} parent=27 // pred_fallthru
          _
        %s200 = sand.u32 %s79, 1
        %s201 = scalar_lea.sflag [#allocation8], %s200
        %s202 = sand.u32 %s79, 1
        %s203 = smul.addr %s202, 64
        %s204 = scalar_lea.vmem [#allocation7], %s203
        // Predicated region
        $region33: #{tpu_custom_call.1} parent=27 // pred_check
          %p205 = pneg %p92
        $region34: #{tpu_custom_call.1} parent=27 // pred_check_branch
          %207 = sbr.rel (%p205) target = $region36
        $region35: #{tpu_custom_call.1} parent=27 // pred_region
          %208 = dma.done %s201, 1024
        $region36: #{tpu_custom_call.1} parent=27 // pred_fallthru
          _
        %s209 = sand.u32 %s53, 1
        %s210 = scalar_lea.sflag [#allocation5], %s209
        %s211 = sand.u32 %s53, 1
        %s212 = smul.addr %s211, 64
        %s213 = scalar_lea.vmem [#allocation4], %s212
        %p214 = pneg %p66
        %p215 = pneg %p63
        %s216 = sand.u32 %s79, 1
        %s217 = scalar_lea.sflag [#allocation8], %s216
        %s218 = sand.u32 %s79, 1
        %s219 = smul.addr %s218, 64
        %s220 = scalar_lea.vmem [#allocation7], %s219
        %p221 = pneg %p92
        %p222 = pneg %p89
        %p223 = pneg %p120
        %p224 = pneg %p117
        %s225 = sand.u32 %s107, 1
        %s226 = scalar_lea.sflag [#allocation6], %s225
        %s227 = sand.u32 %s107, 1
        %s228 = smul.addr %s227, 64
        %s229 = scalar_lea.vmem [#allocation9], %s228
        %s230 = sld [smem:[#allocation3 + %s31]]
        %s231 = smul.u32 %s230, 3
        %s232 = sadd.s32 %s231, %s32
        %s233 = smul.u32 16, %s232
        %s234 = smul.u32 16, %s32
        %v236 = vld [vmem:[%s195] sm:$0xf]
        %v237 = vld [vmem:[%s195 + $0x4] sm:$0xf]
        %v238 = vld [vmem:[%s195 + $0x8] sm:$0xf]
        %v239 = vld [vmem:[%s195 + $0xc] sm:$0xf]
        %v240 = vld [vmem:[%s195 + $0x10] sm:$0xf]
        %v241 = vld [vmem:[%s195 + $0x14] sm:$0xf]
        %v242 = vld [vmem:[%s195 + $0x18] sm:$0xf]
        %v243 = vld [vmem:[%s195 + $0x1c] sm:$0xf]
        %v244 = vld [vmem:[%s195 + $0x20] sm:$0xf]
        %v245 = vld [vmem:[%s195 + $0x24] sm:$0xf]
        %v246 = vld [vmem:[%s195 + $0x28] sm:$0xf]
        %v247 = vld [vmem:[%s195 + $0x2c] sm:$0xf]
        %v248 = vld [vmem:[%s195 + $0x30] sm:$0xf]
        %v249 = vld [vmem:[%s195 + $0x34] sm:$0xf]
        %v250 = vld [vmem:[%s195 + $0x38] sm:$0xf]
        %v251 = vld [vmem:[%s195 + $0x3c] sm:$0xf]
        %v252 = vld [vmem:[%s204] sm:$0xf]
        %v253 = vld [vmem:[%s204 + $0x4] sm:$0xf]
        %v254 = vld [vmem:[%s204 + $0x8] sm:$0xf]
        %v255 = vld [vmem:[%s204 + $0xc] sm:$0xf]
        %v256 = vld [vmem:[%s204 + $0x10] sm:$0xf]
        %v257 = vld [vmem:[%s204 + $0x14] sm:$0xf]
        %v258 = vld [vmem:[%s204 + $0x18] sm:$0xf]
        %v259 = vld [vmem:[%s204 + $0x1c] sm:$0xf]
        %v260 = vld [vmem:[%s204 + $0x20] sm:$0xf]
        %v261 = vld [vmem:[%s204 + $0x24] sm:$0xf]
        %v262 = vld [vmem:[%s204 + $0x28] sm:$0xf]
        %v263 = vld [vmem:[%s204 + $0x2c] sm:$0xf]
        %v264 = vld [vmem:[%s204 + $0x30] sm:$0xf]
        %v265 = vld [vmem:[%s204 + $0x34] sm:$0xf]
        %v266 = vld [vmem:[%s204 + $0x38] sm:$0xf]
        %v267 = vld [vmem:[%s204 + $0x3c] sm:$0xf]
        %v284 = vunpack.c.l.b16 %v236
        %v285 = vunpack.c.l.b16 %v237
        %v286 = vunpack.c.l.b16 %v238
        %v287 = vunpack.c.l.b16 %v239
        %v288 = vunpack.c.l.b16 %v240
        %v289 = vunpack.c.l.b16 %v241
        %v290 = vunpack.c.l.b16 %v242
        %v291 = vunpack.c.l.b16 %v243
        %v292 = vunpack.c.l.b16 %v244
        %v293 = vunpack.c.l.b16 %v245
        %v294 = vunpack.c.l.b16 %v246
        %v295 = vunpack.c.l.b16 %v247
        %v296 = vunpack.c.l.b16 %v248
        %v297 = vunpack.c.l.b16 %v249
        %v298 = vunpack.c.l.b16 %v250
        %v299 = vunpack.c.l.b16 %v251
        %v300 = vpack.c.b16 %v285, %v284
        %v301 = vpack.c.b16 %v287, %v286
        %v302 = vpack.c.b16 %v289, %v288
        %v303 = vpack.c.b16 %v291, %v290
        %v304 = vpack.c.b16 %v293, %v292
        %v305 = vpack.c.b16 %v295, %v294
        %v306 = vpack.c.b16 %v297, %v296
        %v307 = vpack.c.b16 %v299, %v298
        %v332 = vunpack.c.l.b16 %v252
        %v333 = vunpack.c.l.b16 %v253
        %v334 = vunpack.c.l.b16 %v254
        %v335 = vunpack.c.l.b16 %v255
        %v336 = vunpack.c.l.b16 %v256
        %v337 = vunpack.c.l.b16 %v257
        %v338 = vunpack.c.l.b16 %v258
        %v339 = vunpack.c.l.b16 %v259
        %v340 = vunpack.c.l.b16 %v260
        %v341 = vunpack.c.l.b16 %v261
        %v342 = vunpack.c.l.b16 %v262
        %v343 = vunpack.c.l.b16 %v263
        %v344 = vunpack.c.l.b16 %v264
        %v345 = vunpack.c.l.b16 %v265
        %v346 = vunpack.c.l.b16 %v266
        %v347 = vunpack.c.l.b16 %v267
        %v348 = vpack.c.b16 %v333, %v332
        %v349 = vpack.c.b16 %v335, %v334
        %v350 = vpack.c.b16 %v337, %v336
        %v351 = vpack.c.b16 %v339, %v338
        %v352 = vpack.c.b16 %v341, %v340
        %v353 = vpack.c.b16 %v343, %v342
        %v354 = vpack.c.b16 %v345, %v344
        %v355 = vpack.c.b16 %v347, %v346
        %364 = vmatprep.subr.bf16.mxu0 0
        %365 = vmatpush1.bf16.msra.mxu0 %v348
        %366 = vmatprep.subr.bf16.mxu0 0
        %367 = vmatpush1.bf16.msra.mxu0 %v349
        %368 = vmatprep.subr.bf16.mxu0 0
        %369 = vmatpush1.bf16.msra.mxu0 %v350
        %370 = vmatprep.subr.bf16.mxu0 0
        %371 = vmatpush1.bf16.msra.mxu0 %v351
        %372 = vmatprep.subr.bf16.mxu0 0
        %373 = vmatpush1.bf16.msra.mxu0 %v352
        %374 = vmatprep.subr.bf16.mxu0 0
        %375 = vmatpush1.bf16.msra.mxu0 %v353
        %376 = vmatprep.subr.bf16.mxu0 0
        %377 = vmatpush1.bf16.msra.mxu0 %v354
        %378 = vmatprep.subr.bf16.mxu0 0
        %379 = vmatpush1.bf16.msra.mxu0 %v355
        %380 = vmatprep.subr.bf16.mxu0 0
        %381 = vmatpush1.bf16.msra.mxu0 0
        %382 = vmatprep.subr.bf16.mxu0 0
        %383 = vmatpush1.bf16.msra.mxu0 0
        %384 = vmatprep.subr.bf16.mxu0 0
        %385 = vmatpush1.bf16.msra.mxu0 0
        %386 = vmatprep.subr.bf16.mxu0 0
        %387 = vmatpush1.bf16.msra.mxu0 0
        %388 = vmatprep.subr.bf16.mxu0 0
        %389 = vmatpush1.bf16.msra.mxu0 0
        %390 = vmatprep.subr.bf16.mxu0 0
        %391 = vmatpush1.bf16.msra.mxu0 0
        %392 = vmatprep.subr.bf16.mxu0 0
        %393 = vmatpush1.bf16.msra.mxu0 0
        %394 = vmatprep.subr.bf16.mxu0 0
        %395 = vmatpush1.bf16.msra.mxu0 0
        %396 = vmatprep.mubr.bf16.mxu0 0
        %397 = vmatmul.mubr.bf16.gmra.mrb[0].mxu0 %v300
        %v398 = vpop.f32.mrb[0].mxu0
        %v399 = vadd.f32 0.0, %v398
        %v400 = vpop.f32.mrb[0].mxu0
        %v401 = vpop.f32.mrb[0].mxu0
        %v402 = vadd.f32 0.0, %v401
        %v403 = vpop.f32.mrb[0].mxu0
        %404 = vmatprep.mubr.bf16.mxu0 0
        %405 = vmatmul.mubr.bf16.gmra.mrb[0].mxu0 %v301
        %v406 = vpop.f32.mrb[0].mxu0
        %v407 = vadd.f32 0.0, %v406
        %v408 = vpop.f32.mrb[0].mxu0
        %v409 = vpop.f32.mrb[0].mxu0
        %v410 = vadd.f32 0.0, %v409
        %v411 = vpop.f32.mrb[0].mxu0
        %412 = vmatprep.mubr.bf16.mxu0 0
        %413 = vmatmul.mubr.bf16.gmra.mrb[0].mxu0 %v302
        %v414 = vpop.f32.mrb[0].mxu0
        %v415 = vadd.f32 0.0, %v414
        %v416 = vpop.f32.mrb[0].mxu0
        %v417 = vpop.f32.mrb[0].mxu0
        %v418 = vadd.f32 0.0, %v417
        %v419 = vpop.f32.mrb[0].mxu0
        %420 = vmatprep.mubr.bf16.mxu0 0
        %421 = vmatmul.mubr.bf16.gmra.mrb[0].mxu0 %v303
        %v422 = vpop.f32.mrb[0].mxu0
        %v423 = vadd.f32 0.0, %v422
        %v424 = vpop.f32.mrb[0].mxu0
        %v425 = vpop.f32.mrb[0].mxu0
        %v426 = vadd.f32 0.0, %v425
        %v427 = vpop.f32.mrb[0].mxu0
        %428 = vmatprep.mubr.bf16.mxu0 0
        %429 = vmatmul.mubr.bf16.gmra.mrb[0].mxu0 %v304
        %v430 = vpop.f32.mrb[0].mxu0
        %v431 = vadd.f32 0.0, %v430
        %v432 = vpop.f32.mrb[0].mxu0
        %v433 = vpop.f32.mrb[0].mxu0
        %v434 = vadd.f32 0.0, %v433
        %v435 = vpop.f32.mrb[0].mxu0
        %436 = vmatprep.mubr.bf16.mxu0 0
        %437 = vmatmul.mubr.bf16.gmra.mrb[0].mxu0 %v305
        %v438 = vpop.f32.mrb[0].mxu0
        %v439 = vadd.f32 0.0, %v438
        %v440 = vpop.f32.mrb[0].mxu0
        %v441 = vpop.f32.mrb[0].mxu0
        %v442 = vadd.f32 0.0, %v441
        %v443 = vpop.f32.mrb[0].mxu0
        %444 = vmatprep.mubr.bf16.mxu0 0
        %445 = vmatmul.mubr.bf16.gmra.mrb[0].mxu0 %v306
        %v446 = vpop.f32.mrb[0].mxu0
        %v447 = vadd.f32 0.0, %v446
        %v448 = vpop.f32.mrb[0].mxu0
        %v449 = vpop.f32.mrb[0].mxu0
        %v450 = vadd.f32 0.0, %v449
        %v451 = vpop.f32.mrb[0].mxu0
        %452 = vmatprep.mubr.bf16.mxu0 0
        %453 = vmatmul.mubr.bf16.gmra.mrb[0].mxu0 %v307
        %v454 = vpop.f32.mrb[0].mxu0
        %v455 = vadd.f32 0.0, %v454
        %v456 = vpop.f32.mrb[0].mxu0
        %v457 = vpop.f32.mrb[0].mxu0
        %v458 = vadd.f32 0.0, %v457
        %v459 = vpop.f32.mrb[0].mxu0
        %460 = vdwg.mxu0
        %v461 = vpack.c.bf16 %v402, %v399
        %v462 = vpack.c.bf16 %v410, %v407
        %v463 = vpack.c.bf16 %v418, %v415
        %v464 = vpack.c.bf16 %v426, %v423
        %v465 = vpack.c.bf16 %v434, %v431
        %v466 = vpack.c.bf16 %v442, %v439
        %v467 = vpack.c.bf16 %v450, %v447
        %v468 = vpack.c.bf16 %v458, %v455
        %v477 = vunpack.c.l.b16 %v461
        %v478 = vunpack.c.h.b16 %v461
        %v479 = vunpack.c.l.b16 %v462
        %v480 = vunpack.c.h.b16 %v462
        %v481 = vunpack.c.l.b16 %v463
        %v482 = vunpack.c.h.b16 %v463
        %v483 = vunpack.c.l.b16 %v464
        %v484 = vunpack.c.h.b16 %v464
        %v485 = vunpack.c.l.b16 %v465
        %v486 = vunpack.c.h.b16 %v465
        %v487 = vunpack.c.l.b16 %v466
        %v488 = vunpack.c.h.b16 %v466
        %v489 = vunpack.c.l.b16 %v467
        %v490 = vunpack.c.h.b16 %v467
        %v491 = vunpack.c.l.b16 %v468
        %v492 = vunpack.c.h.b16 %v468
        %v493 = vpack.c.b16 %v477, %v477
        %v494 = vpack.c.b16 %v478, %v478
        %v495 = vpack.c.b16 %v479, %v479
        %v496 = vpack.c.b16 %v480, %v480
        %v497 = vpack.c.b16 %v481, %v481
        %v498 = vpack.c.b16 %v482, %v482
        %v499 = vpack.c.b16 %v483, %v483
        %v500 = vpack.c.b16 %v484, %v484
        %v501 = vpack.c.b16 %v485, %v485
        %v502 = vpack.c.b16 %v486, %v486
        %v503 = vpack.c.b16 %v487, %v487
        %v504 = vpack.c.b16 %v488, %v488
        %v505 = vpack.c.b16 %v489, %v489
        %v506 = vpack.c.b16 %v490, %v490
        %v507 = vpack.c.b16 %v491, %v491
        %v508 = vpack.c.b16 %v492, %v492
        %525 = vst [vmem:[%s229] sm:$0xf] %v493
        %526 = vst [vmem:[%s229 + $0x4] sm:$0xf] %v494
        %527 = vst [vmem:[%s229 + $0x8] sm:$0xf] %v495
        %528 = vst [vmem:[%s229 + $0xc] sm:$0xf] %v496
        %529 = vst [vmem:[%s229 + $0x10] sm:$0xf] %v497
        %530 = vst [vmem:[%s229 + $0x14] sm:$0xf] %v498
        %531 = vst [vmem:[%s229 + $0x18] sm:$0xf] %v499
        %532 = vst [vmem:[%s229 + $0x1c] sm:$0xf] %v500
        %533 = vst [vmem:[%s229 + $0x20] sm:$0xf] %v501
        %534 = vst [vmem:[%s229 + $0x24] sm:$0xf] %v502
        %535 = vst [vmem:[%s229 + $0x28] sm:$0xf] %v503
        %536 = vst [vmem:[%s229 + $0x2c] sm:$0xf] %v504
        %537 = vst [vmem:[%s229 + $0x30] sm:$0xf] %v505
        %538 = vst [vmem:[%s229 + $0x34] sm:$0xf] %v506
        %539 = vst [vmem:[%s229 + $0x38] sm:$0xf] %v507
        %540 = vst [vmem:[%s229 + $0x3c] sm:$0xf] %v508
        %s541 = sand.u32 %s107, 1
        %s542 = scalar_lea.sflag [#allocation6], %s541
        %s543 = sand.u32 %s107, 1
        %s544 = smul.addr %s543, 64
        %s545 = scalar_lea.vmem [#allocation9], %s544
        // Predicated region
        $region37: #{tpu_custom_call.1} parent=27 // pred_check
          %p546 = pneg %p117
        $region38: #{tpu_custom_call.1} parent=27 // pred_check_branch
          %548 = sbr.rel (%p546) target = $region40
        $region39: #{tpu_custom_call.1} parent=27 // pred_region
          %s549 = smul.u32 16, %s32
          %s551 = ssub.s32 1024, 1024
          %552 = vsyncadd %s542, %s551
          %s553 = smul.addr %s31, 48
          %s554 = sadd.s32 %s549, %s553
          %s555 = smul.addr %s554, 64
          %s556 = scalar_lea.hbm %s3, %s555
          %s557 = sshll.u32 %s545, 4
          %s558 = int_to_ptr.vmem [resolvable:$true] %s557
          %563 = dma.vmem_to_hbm [thread:$0]  %s558, 1024, %s556, %s542, 64, 64, 4
        $region40: #{tpu_custom_call.1} parent=27 // pred_fallthru
          _
      $region28: #{tpu_custom_call.1} parent=5 // pred_fallthru
        _
      %p564 = scmp.le.s32.totalorder 2, %s22
      // Predicated region
      $region41: #{tpu_custom_call.1} parent=5 // pred_check
        %p565 = pneg %p564
      $region42: #{tpu_custom_call.1} parent=5 // pred_check_branch
        %567 = sbr.rel (%p565) target = $region44
      $region43: #{tpu_custom_call.1} parent=5 // pred_region
        %s568 = ssub.s32 %s22, 2
        // Predicated region
        $region45: #{tpu_custom_call.1} parent=43 // pred_check
          %p569 = pneg %p123
        $region46: #{tpu_custom_call.1} parent=43 // pred_check_branch
          %571 = sbr.rel (%p569) target = $region48
        $region47: #{tpu_custom_call.1} parent=43 // pred_region
          %s572 = sand.u32 %s108, 1
          %s573 = scalar_lea.sflag [#allocation6], %s572
          %s574 = sand.u32 %s108, 1
          %s575 = smul.addr %s574, 64
          %s576 = scalar_lea.vmem [#allocation9], %s575
          %577 = dma.done %s573, 1024
        $region48: #{tpu_custom_call.1} parent=43 // pred_fallthru
          _
      $region44: #{tpu_custom_call.1} parent=5 // pred_fallthru
        _
    $region6: #{tpu_custom_call.1} parent=1 // loop_footer
      %s26 = sadd.s32 1, %s22
    $region7: #{tpu_custom_call.1} parent=1 // loop_footer_branch
      %21 = sbr.rel target = $region3
    $region8: #{tpu_custom_call.1} parent=1 // loop_exit
      _
    %578 = vsyncpa [#allocation5], 1
    %s579 = scalar_lea.sflag [#allocation5], 1
    %580 = vsyncpa %s579, 1
    %581 = vsyncpa [#allocation8], 1
    %s582 = scalar_lea.sflag [#allocation8], 1
    %583 = vsyncpa %s582, 1
    %584 = vsyncpa [#allocation6], 1
    %s585 = scalar_lea.sflag [#allocation6], 1
    %586 = vsyncpa %s585, 1

</llo_original>
